<compile_context>
chip_gen: v7x
topology: tpu7x:2x2x1
jax: 0.10.0
libtpu: 0.0.40
codegen_flags: <defaults>
</compile_context>

<pallas_src>
import math
import functools

import jax
import jax.numpy as jnp
from jax import lax
from jax.experimental import pallas as pl
from jax.experimental.pallas import tpu as pltpu


def _round_up(x: int, m: int) -> int:
    return ((x + m - 1) // m) * m


def _conv_embed_kernel(x_ref, w_ref, b_ref, o_ref, *, K, C, D, G, stride, rows):
    """One (batch b, L-tile j) grid step.

    x_ref: (1, Lr, F*C) f32   whole padded sequence of batch b, space-to-depth by F = G*stride
    w_ref: (K, C, D)    bf16  conv weight, w_ref[k][c, d] = weight[d, c, k]
    b_ref: (1, G*D)     f32   bias tiled G times along lanes
    o_ref: (1, rows, G*D)     output slab tile; row r packs output positions G*(j*rows + r) + g
    """
    F = G * stride
    row0 = pl.multiple_of(pl.program_id(1) * rows, 8)   # first slab row of this tile

    cols = []
    for g in range(G):
        acc = jnp.zeros((rows, D), jnp.float32)
        for k in range(K):
            # output position t = G*r + g reads flat input row t*stride + k
            # = F*r + (g*stride + k)  ->  xr row (r + q), lane block p, with q, p static.
            q, p = divmod(g * stride + k, F)
            win = x_ref[0, pl.ds(row0 + q, rows), pl.ds(p * C, C)]        # (rows, C) f32
            acc = acc + jnp.dot(win.astype(w_ref.dtype), w_ref[k],
                                preferred_element_type=jnp.float32)       # MXU, f32 accum
        cols.append(acc)

    slab = cols[0] if G == 1 else jnp.concatenate(cols, axis=-1)          # (rows, G*D) f32
    o_ref[0] = (slab + b_ref[...]).astype(o_ref.dtype)                    # lane-dense store


def conv1d_embedding(x, weight, bias, *, stride: int, padding: int,
                     target_rows: int = 512, vmem_budget_bytes: int = 24 << 20):
    """x: (B, L_in, C_in); weight: (D, C_in, K) [PyTorch Conv1d layout]; bias: (D,)."""
    B, L_in, C = x.shape
    D, C_w, K = weight.shape
    assert C_w == C
    L_out = (L_in + 2 * padding - K) // stride + 1
    assert L_out >= 1
    out_dtype = x.dtype

    # Pack G consecutive output positions per 128-lane output row (unmasked stores for small D).
    G = (128 // D) if (D < 128 and 128 % D == 0) else 1
    F = G * stride            # flat input rows consumed per packed output row
    unit = 8 * G              # output positions per minimal (8-sublane) output block

    def plan(tl):
        n_tiles = -(-L_out // tl)
        lp = n_tiles * tl                      # L_out rounded up to a multiple of tl
        rows = tl // G
        l_need = (lp - 1) * stride + K         # flat input rows the kernel may touch
        total = _round_up(max(l_need, L_in + 2 * padding), F)
        lr = total // F
        est = (2 * lr * F * C * 4              # resident x block (f32), double-buffered
               + 4 * rows * G * D * 4          # out block (2x) + f32 accumulators
               + 2 * K * C * D * 2             # bf16 weights
               + 2 * G * D * 4)                # bias
        return n_tiles, lp, rows, total, lr, est

    # Target ~target_rows GEMM rows per grid step; shrink (multiples of 8*G) to fit VMEM budget
    # (budget chosen to be comfortable on v7x: 64 MiB physical / 32 MiB default-scoped VMEM).
    tl = min(_round_up(target_rows * G, unit), _round_up(L_out, unit))
    n_tiles, Lp, rows, total, Lr, est = plan(tl)
    while est > vmem_budget_bytes and tl > unit:
        tl = max(unit, (tl // 2) // unit * unit)
        n_tiles, Lp, rows, total, Lr, est = plan(tl)

    # ---- glue: pad once + free space-to-depth reshape (no im2col inflation, no FLOPs) ----
    x_f32 = x.astype(jnp.float32)
    x_pad = jnp.pad(x_f32, ((0, 0), (padding, total - L_in - padding), (0, 0)))
    xr = x_pad.reshape(B, Lr, F * C)                                       # (B, Lr, F*C)

    w_kcd = jnp.transpose(weight, (2, 1, 0)).astype(jnp.bfloat16)          # (K, C, D)
    b_lane = jnp.tile(bias.astype(jnp.float32).reshape(1, D), (1, G))      # (1, G*D)

    kernel = functools.partial(_conv_embed_kernel,
                               K=K, C=C, D=D, G=G, stride=stride, rows=rows)

    out_itemsize = jnp.dtype(out_dtype).itemsize
    cost = pl.CostEstimate(
        flops=2 * B * Lp * K * C * D,
        transcendentals=0,
        bytes_accessed=(B * Lr * F * C * 4 + K * C * D * 2 + G * D * 4
                        + B * Lp * D * out_itemsize))

    vmem_limit = int(min(2 * est + (2 << 20), 48 << 20)) if est > (12 << 20) else None

    out_packed = pl.pallas_call(
        kernel,
        out_shape=jax.ShapeDtypeStruct((B, Lp // G, G * D), out_dtype),
        grid_spec=pltpu.PrefetchScalarGridSpec(
            num_scalar_prefetch=0,
            grid=(B, n_tiles),                 # many steps -> pipelining + megacore sharding
            in_specs=[
                # whole padded sequence of batch b stays resident across its L-tiles (1 DMA / b)
                pl.BlockSpec((1, Lr, F * C), lambda b, j: (b, 0, 0)),
                # constant-index weight / bias blocks (tiny; Buffered(1) if they ever grow)
                pl.BlockSpec((K, C, D), lambda b, j: (0, 0, 0)),
                pl.BlockSpec((1, G * D), lambda b, j: (0, 0)),
            ],
            out_specs=pl.BlockSpec((1, rows, G * D), lambda b, j: (b, j, 0)),
        ),
        compiler_params=pltpu.CompilerParams(
            dimension_semantics=("parallel", "parallel"),
            vmem_limit_bytes=vmem_limit,
        ),
        cost_estimate=cost,
    )(xr, w_kcd, b_lane)

    # Free row-major view back to (B, Lp, D); drop the round-up rows.
    return out_packed.reshape(B, Lp, D)[:, :L_out, :]


def _reference_conv(x, weight, bias, *, stride: int, padding: int):
    x_nch = jnp.transpose(x, (0, 2, 1))
    y = lax.conv_general_dilated(
        x_nch, weight,
        window_strides=(stride,), padding=((padding, padding),),
        dimension_numbers=("NCH", "OIH", "NCH"),
    )
    y = y + bias[None, :, None]
    return jnp.transpose(y, (0, 2, 1))


if __name__ == "__main__":
    configs = [
        # matches the module's typical small shapes (exercises the G=4 lane-packed path)
        dict(in_features=4, d_model=32, kernel_size=3, stride=2, padding=1, batch=2, in_seq_len=16),
        # lane-dense d_model (exercises the G=1 path, odd sequence length)
        dict(in_features=4, d_model=128, kernel_size=3, stride=2, padding=1, batch=2, in_seq_len=17),
    ]

    key = jax.random.PRNGKey(0)
    for cfg in configs:
        key, kx, kw, kb = jax.random.split(key, 4)
        C, D, K = cfg["in_features"], cfg["d_model"], cfg["kernel_size"]
        s, p, B, L = cfg["stride"], cfg["padding"], cfg["batch"], cfg["in_seq_len"]

        # nn.Conv1d default init: uniform(-1/sqrt(fan_in), 1/sqrt(fan_in)), fan_in = C_in * K
        bound = 1.0 / math.sqrt(C * K)
        weight = jax.random.uniform(kw, (D, C, K), jnp.float32, -bound, bound)
        bias = jax.random.uniform(kb, (D,), jnp.float32, -bound, bound)
        x = jax.random.normal(kx, (B, L, C), jnp.float32)

        fn = jax.jit(functools.partial(conv1d_embedding, stride=s, padding=p))
        out = jax.block_until_ready(fn(x, weight, bias))

        L_out = (L + 2 * p - K) // s + 1
        assert out.shape == (B, L_out, D), out.shape

        # Reference with the same intentional bf16 rounding of x/weight (f32 accumulation).
        ref = _reference_conv(x.astype(jnp.bfloat16).astype(jnp.float32),
                              weight.astype(jnp.bfloat16).astype(jnp.float32),
                              bias, stride=s, padding=p)
        max_err = float(jnp.max(jnp.abs(out - ref)))
        assert jnp.allclose(out, ref, atol=1e-4, rtol=1e-4), f"mismatch, max abs err {max_err}"

    print("KERNEL_OK")
</pallas_src>

<mosaic_0001>
module attributes {stable_mosaic.version = 11 : i64} {
  func.func @_conv_embed_kernel(%arg0: i32, %arg1: i32, %arg2: memref<1x9x32xf32, #tpu.memory_space<vmem>>, %arg3: memref<3x4x32xbf16, #tpu.memory_space<vmem>>, %arg4: memref<1x128xf32, #tpu.memory_space<vmem>>, %arg5: memref<1x8x128xf32, #tpu.memory_space<vmem>>) attributes {dimension_semantics = [#tpu.dimension_semantics<parallel>, #tpu.dimension_semantics<parallel>], iteration_bounds = array<i64: 2, 1>, scalar_prefetch = 0 : i64, scratch_operands = 0 : i64, tpu.core_type = #tpu.core_type<tc>, window_params = [{transform_indices = @transform_0, window_bounds = array<i64: 1, 9, 32>}, {pipeline_mode = #tpu.pipeline_mode<synchronous>, transform_indices = @transform_1, window_bounds = array<i64: 3, 4, 32>}, {pipeline_mode = #tpu.pipeline_mode<synchronous>, transform_indices = @transform_2, window_bounds = array<i64: 1, 128>}, {transform_indices = @transform_3, window_bounds = array<i64: 1, 8, 128>}]} {
    %c8_i32 = arith.constant 8 : i32
    %0 = arith.muli %arg1, %c8_i32 : i32
    %1 = tpu.assume_multiple %0, 8 : i32
    %cst = arith.constant 0.000000e+00 : f32
    %2 = vector.broadcast %cst : f32 to vector<8x32xf32>
    %c0_i32 = arith.constant 0 : i32
    %3 = arith.addi %1, %c0_i32 : i32
    %c0 = arith.constant 0 : index
    %4 = arith.index_cast %3 : i32 to index
    %c0_0 = arith.constant 0 : index
    %5 = vector.load %arg2[%c0, %4, %c0_0] : memref<1x9x32xf32, #tpu.memory_space<vmem>>, vector<1x8x4xf32>
    %6 = vector.shape_cast %5 : vector<1x8x4xf32> to vector<8x4xf32>
    %7 = arith.truncf %6 : vector<8x4xf32> to vector<8x4xbf16>
    %c0_1 = arith.constant 0 : index
    %c0_2 = arith.constant 0 : index
    %c0_3 = arith.constant 0 : index
    %8 = vector.load %arg3[%c0_1, %c0_2, %c0_3] : memref<3x4x32xbf16, #tpu.memory_space<vmem>>, vector<1x4x32xbf16>
    %9 = vector.shape_cast %8 : vector<1x4x32xbf16> to vector<4x32xbf16>
    %cst_4 = arith.constant dense<0.000000e+00> : vector<8x32xf32>
    %10 = tpu.matmul %7, %9, %cst_4 {dimension_numbers = #tpu.dot_dimension_numbers<[1], [0], [0], [1], [0, 0, 1, 1], [], []>} : vector<8x4xbf16>, vector<4x32xbf16>, vector<8x32xf32> -> vector<8x32xf32>
    %11 = arith.addf %2, %10 : vector<8x32xf32>
    %c0_i32_5 = arith.constant 0 : i32
    %12 = arith.addi %1, %c0_i32_5 : i32
    %c0_6 = arith.constant 0 : index
    %13 = arith.index_cast %12 : i32 to index
    %c4 = arith.constant 4 : index
    %14 = vector.load %arg2[%c0_6, %13, %c4] : memref<1x9x32xf32, #tpu.memory_space<vmem>>, vector<1x8x4xf32>
    %15 = vector.shape_cast %14 : vector<1x8x4xf32> to vector<8x4xf32>
    %16 = arith.truncf %15 : vector<8x4xf32> to vector<8x4xbf16>
    %c1 = arith.constant 1 : index
    %c0_7 = arith.constant 0 : index
    %c0_8 = arith.constant 0 : index
    %17 = vector.load %arg3[%c1, %c0_7, %c0_8] : memref<3x4x32xbf16, #tpu.memory_space<vmem>>, vector<1x4x32xbf16>
    %18 = vector.shape_cast %17 : vector<1x4x32xbf16> to vector<4x32xbf16>
    %cst_9 = arith.constant dense<0.000000e+00> : vector<8x32xf32>
    %19 = tpu.matmul %16, %18, %cst_9 {dimension_numbers = #tpu.dot_dimension_numbers<[1], [0], [0], [1], [0, 0, 1, 1], [], []>} : vector<8x4xbf16>, vector<4x32xbf16>, vector<8x32xf32> -> vector<8x32xf32>
    %20 = arith.addf %11, %19 : vector<8x32xf32>
    %c0_i32_10 = arith.constant 0 : i32
    %21 = arith.addi %1, %c0_i32_10 : i32
    %c0_11 = arith.constant 0 : index
    %22 = arith.index_cast %21 : i32 to index
    %c8 = arith.constant 8 : index
    %23 = vector.load %arg2[%c0_11, %22, %c8] : memref<1x9x32xf32, #tpu.memory_space<vmem>>, vector<1x8x4xf32>
    %24 = vector.shape_cast %23 : vector<1x8x4xf32> to vector<8x4xf32>
    %25 = arith.truncf %24 : vector<8x4xf32> to vector<8x4xbf16>
    %c2 = arith.constant 2 : index
    %c0_12 = arith.constant 0 : index
    %c0_13 = arith.constant 0 : index
    %26 = vector.load %arg3[%c2, %c0_12, %c0_13] : memref<3x4x32xbf16, #tpu.memory_space<vmem>>, vector<1x4x32xbf16>
    %27 = vector.shape_cast %26 : vector<1x4x32xbf16> to vector<4x32xbf16>
    %cst_14 = arith.constant dense<0.000000e+00> : vector<8x32xf32>
    %28 = tpu.matmul %25, %27, %cst_14 {dimension_numbers = #tpu.dot_dimension_numbers<[1], [0], [0], [1], [0, 0, 1, 1], [], []>} : vector<8x4xbf16>, vector<4x32xbf16>, vector<8x32xf32> -> vector<8x32xf32>
    %29 = arith.addf %20, %28 : vector<8x32xf32>
    %cst_15 = arith.constant 0.000000e+00 : f32
    %30 = vector.broadcast %cst_15 : f32 to vector<8x32xf32>
    %c0_i32_16 = arith.constant 0 : i32
    %31 = arith.addi %1, %c0_i32_16 : i32
    %c0_17 = arith.constant 0 : index
    %32 = arith.index_cast %31 : i32 to index
    %c8_18 = arith.constant 8 : index
    %33 = vector.load %arg2[%c0_17, %32, %c8_18] : memref<1x9x32xf32, #tpu.memory_space<vmem>>, vector<1x8x4xf32>
    %34 = vector.shape_cast %33 : vector<1x8x4xf32> to vector<8x4xf32>
    %35 = arith.truncf %34 : vector<8x4xf32> to vector<8x4xbf16>
    %c0_19 = arith.constant 0 : index
    %c0_20 = arith.constant 0 : index
    %c0_21 = arith.constant 0 : index
    %36 = vector.load %arg3[%c0_19, %c0_20, %c0_21] : memref<3x4x32xbf16, #tpu.memory_space<vmem>>, vector<1x4x32xbf16>
    %37 = vector.shape_cast %36 : vector<1x4x32xbf16> to vector<4x32xbf16>
    %cst_22 = arith.constant dense<0.000000e+00> : vector<8x32xf32>
    %38 = tpu.matmul %35, %37, %cst_22 {dimension_numbers = #tpu.dot_dimension_numbers<[1], [0], [0], [1], [0, 0, 1, 1], [], []>} : vector<8x4xbf16>, vector<4x32xbf16>, vector<8x32xf32> -> vector<8x32xf32>
    %39 = arith.addf %30, %38 : vector<8x32xf32>
    %c0_i32_23 = arith.constant 0 : i32
    %40 = arith.addi %1, %c0_i32_23 : i32
    %c0_24 = arith.constant 0 : index
    %41 = arith.index_cast %40 : i32 to index
    %c12 = arith.constant 12 : index
    %42 = vector.load %arg2[%c0_24, %41, %c12] : memref<1x9x32xf32, #tpu.memory_space<vmem>>, vector<1x8x4xf32>
    %43 = vector.shape_cast %42 : vector<1x8x4xf32> to vector<8x4xf32>
    %44 = arith.truncf %43 : vector<8x4xf32> to vector<8x4xbf16>
    %c1_25 = arith.constant 1 : index
    %c0_26 = arith.constant 0 : index
    %c0_27 = arith.constant 0 : index
    %45 = vector.load %arg3[%c1_25, %c0_26, %c0_27] : memref<3x4x32xbf16, #tpu.memory_space<vmem>>, vector<1x4x32xbf16>
    %46 = vector.shape_cast %45 : vector<1x4x32xbf16> to vector<4x32xbf16>
    %cst_28 = arith.constant dense<0.000000e+00> : vector<8x32xf32>
    %47 = tpu.matmul %44, %46, %cst_28 {dimension_numbers = #tpu.dot_dimension_numbers<[1], [0], [0], [1], [0, 0, 1, 1], [], []>} : vector<8x4xbf16>, vector<4x32xbf16>, vector<8x32xf32> -> vector<8x32xf32>
    %48 = arith.addf %39, %47 : vector<8x32xf32>
    %c0_i32_29 = arith.constant 0 : i32
    %49 = arith.addi %1, %c0_i32_29 : i32
    %c0_30 = arith.constant 0 : index
    %50 = arith.index_cast %49 : i32 to index
    %c16 = arith.constant 16 : index
    %51 = vector.load %arg2[%c0_30, %50, %c16] : memref<1x9x32xf32, #tpu.memory_space<vmem>>, vector<1x8x4xf32>
    %52 = vector.shape_cast %51 : vector<1x8x4xf32> to vector<8x4xf32>
    %53 = arith.truncf %52 : vector<8x4xf32> to vector<8x4xbf16>
    %c2_31 = arith.constant 2 : index
    %c0_32 = arith.constant 0 : index
    %c0_33 = arith.constant 0 : index
    %54 = vector.load %arg3[%c2_31, %c0_32, %c0_33] : memref<3x4x32xbf16, #tpu.memory_space<vmem>>, vector<1x4x32xbf16>
    %55 = vector.shape_cast %54 : vector<1x4x32xbf16> to vector<4x32xbf16>
    %cst_34 = arith.constant dense<0.000000e+00> : vector<8x32xf32>
    %56 = tpu.matmul %53, %55, %cst_34 {dimension_numbers = #tpu.dot_dimension_numbers<[1], [0], [0], [1], [0, 0, 1, 1], [], []>} : vector<8x4xbf16>, vector<4x32xbf16>, vector<8x32xf32> -> vector<8x32xf32>
    %57 = arith.addf %48, %56 : vector<8x32xf32>
    %cst_35 = arith.constant 0.000000e+00 : f32
    %58 = vector.broadcast %cst_35 : f32 to vector<8x32xf32>
    %c0_i32_36 = arith.constant 0 : i32
    %59 = arith.addi %1, %c0_i32_36 : i32
    %c0_37 = arith.constant 0 : index
    %60 = arith.index_cast %59 : i32 to index
    %c16_38 = arith.constant 16 : index
    %61 = vector.load %arg2[%c0_37, %60, %c16_38] : memref<1x9x32xf32, #tpu.memory_space<vmem>>, vector<1x8x4xf32>
    %62 = vector.shape_cast %61 : vector<1x8x4xf32> to vector<8x4xf32>
    %63 = arith.truncf %62 : vector<8x4xf32> to vector<8x4xbf16>
    %c0_39 = arith.constant 0 : index
    %c0_40 = arith.constant 0 : index
    %c0_41 = arith.constant 0 : index
    %64 = vector.load %arg3[%c0_39, %c0_40, %c0_41] : memref<3x4x32xbf16, #tpu.memory_space<vmem>>, vector<1x4x32xbf16>
    %65 = vector.shape_cast %64 : vector<1x4x32xbf16> to vector<4x32xbf16>
    %cst_42 = arith.constant dense<0.000000e+00> : vector<8x32xf32>
    %66 = tpu.matmul %63, %65, %cst_42 {dimension_numbers = #tpu.dot_dimension_numbers<[1], [0], [0], [1], [0, 0, 1, 1], [], []>} : vector<8x4xbf16>, vector<4x32xbf16>, vector<8x32xf32> -> vector<8x32xf32>
    %67 = arith.addf %58, %66 : vector<8x32xf32>
    %c0_i32_43 = arith.constant 0 : i32
    %68 = arith.addi %1, %c0_i32_43 : i32
    %c0_44 = arith.constant 0 : index
    %69 = arith.index_cast %68 : i32 to index
    %c20 = arith.constant 20 : index
    %70 = vector.load %arg2[%c0_44, %69, %c20] : memref<1x9x32xf32, #tpu.memory_space<vmem>>, vector<1x8x4xf32>
    %71 = vector.shape_cast %70 : vector<1x8x4xf32> to vector<8x4xf32>
    %72 = arith.truncf %71 : vector<8x4xf32> to vector<8x4xbf16>
    %c1_45 = arith.constant 1 : index
    %c0_46 = arith.constant 0 : index
    %c0_47 = arith.constant 0 : index
    %73 = vector.load %arg3[%c1_45, %c0_46, %c0_47] : memref<3x4x32xbf16, #tpu.memory_space<vmem>>, vector<1x4x32xbf16>
    %74 = vector.shape_cast %73 : vector<1x4x32xbf16> to vector<4x32xbf16>
    %cst_48 = arith.constant dense<0.000000e+00> : vector<8x32xf32>
    %75 = tpu.matmul %72, %74, %cst_48 {dimension_numbers = #tpu.dot_dimension_numbers<[1], [0], [0], [1], [0, 0, 1, 1], [], []>} : vector<8x4xbf16>, vector<4x32xbf16>, vector<8x32xf32> -> vector<8x32xf32>
    %76 = arith.addf %67, %75 : vector<8x32xf32>
    %c0_i32_49 = arith.constant 0 : i32
    %77 = arith.addi %1, %c0_i32_49 : i32
    %c0_50 = arith.constant 0 : index
    %78 = arith.index_cast %77 : i32 to index
    %c24 = arith.constant 24 : index
    %79 = vector.load %arg2[%c0_50, %78, %c24] : memref<1x9x32xf32, #tpu.memory_space<vmem>>, vector<1x8x4xf32>
    %80 = vector.shape_cast %79 : vector<1x8x4xf32> to vector<8x4xf32>
    %81 = arith.truncf %80 : vector<8x4xf32> to vector<8x4xbf16>
    %c2_51 = arith.constant 2 : index
    %c0_52 = arith.constant 0 : index
    %c0_53 = arith.constant 0 : index
    %82 = vector.load %arg3[%c2_51, %c0_52, %c0_53] : memref<3x4x32xbf16, #tpu.memory_space<vmem>>, vector<1x4x32xbf16>
    %83 = vector.shape_cast %82 : vector<1x4x32xbf16> to vector<4x32xbf16>
    %cst_54 = arith.constant dense<0.000000e+00> : vector<8x32xf32>
    %84 = tpu.matmul %81, %83, %cst_54 {dimension_numbers = #tpu.dot_dimension_numbers<[1], [0], [0], [1], [0, 0, 1, 1], [], []>} : vector<8x4xbf16>, vector<4x32xbf16>, vector<8x32xf32> -> vector<8x32xf32>
    %85 = arith.addf %76, %84 : vector<8x32xf32>
    %cst_55 = arith.constant 0.000000e+00 : f32
    %86 = vector.broadcast %cst_55 : f32 to vector<8x32xf32>
    %c0_i32_56 = arith.constant 0 : i32
    %87 = arith.addi %1, %c0_i32_56 : i32
    %c0_57 = arith.constant 0 : index
    %88 = arith.index_cast %87 : i32 to index
    %c24_58 = arith.constant 24 : index
    %89 = vector.load %arg2[%c0_57, %88, %c24_58] : memref<1x9x32xf32, #tpu.memory_space<vmem>>, vector<1x8x4xf32>
    %90 = vector.shape_cast %89 : vector<1x8x4xf32> to vector<8x4xf32>
    %91 = arith.truncf %90 : vector<8x4xf32> to vector<8x4xbf16>
    %c0_59 = arith.constant 0 : index
    %c0_60 = arith.constant 0 : index
    %c0_61 = arith.constant 0 : index
    %92 = vector.load %arg3[%c0_59, %c0_60, %c0_61] : memref<3x4x32xbf16, #tpu.memory_space<vmem>>, vector<1x4x32xbf16>
    %93 = vector.shape_cast %92 : vector<1x4x32xbf16> to vector<4x32xbf16>
    %cst_62 = arith.constant dense<0.000000e+00> : vector<8x32xf32>
    %94 = tpu.matmul %91, %93, %cst_62 {dimension_numbers = #tpu.dot_dimension_numbers<[1], [0], [0], [1], [0, 0, 1, 1], [], []>} : vector<8x4xbf16>, vector<4x32xbf16>, vector<8x32xf32> -> vector<8x32xf32>
    %95 = arith.addf %86, %94 : vector<8x32xf32>
    %c0_i32_63 = arith.constant 0 : i32
    %96 = arith.addi %1, %c0_i32_63 : i32
    %c0_64 = arith.constant 0 : index
    %97 = arith.index_cast %96 : i32 to index
    %c28 = arith.constant 28 : index
    %98 = vector.load %arg2[%c0_64, %97, %c28] : memref<1x9x32xf32, #tpu.memory_space<vmem>>, vector<1x8x4xf32>
    %99 = vector.shape_cast %98 : vector<1x8x4xf32> to vector<8x4xf32>
    %100 = arith.truncf %99 : vector<8x4xf32> to vector<8x4xbf16>
    %c1_65 = arith.constant 1 : index
    %c0_66 = arith.constant 0 : index
    %c0_67 = arith.constant 0 : index
    %101 = vector.load %arg3[%c1_65, %c0_66, %c0_67] : memref<3x4x32xbf16, #tpu.memory_space<vmem>>, vector<1x4x32xbf16>
    %102 = vector.shape_cast %101 : vector<1x4x32xbf16> to vector<4x32xbf16>
    %cst_68 = arith.constant dense<0.000000e+00> : vector<8x32xf32>
    %103 = tpu.matmul %100, %102, %cst_68 {dimension_numbers = #tpu.dot_dimension_numbers<[1], [0], [0], [1], [0, 0, 1, 1], [], []>} : vector<8x4xbf16>, vector<4x32xbf16>, vector<8x32xf32> -> vector<8x32xf32>
    %104 = arith.addf %95, %103 : vector<8x32xf32>
    %c1_i32 = arith.constant 1 : i32
    %105 = arith.addi %1, %c1_i32 : i32
    %c0_69 = arith.constant 0 : index
    %106 = arith.index_cast %105 : i32 to index
    %c0_70 = arith.constant 0 : index
    %107 = vector.load %arg2[%c0_69, %106, %c0_70] : memref<1x9x32xf32, #tpu.memory_space<vmem>>, vector<1x8x4xf32>
    %108 = vector.shape_cast %107 : vector<1x8x4xf32> to vector<8x4xf32>
    %109 = arith.truncf %108 : vector<8x4xf32> to vector<8x4xbf16>
    %c2_71 = arith.constant 2 : index
    %c0_72 = arith.constant 0 : index
    %c0_73 = arith.constant 0 : index
    %110 = vector.load %arg3[%c2_71, %c0_72, %c0_73] : memref<3x4x32xbf16, #tpu.memory_space<vmem>>, vector<1x4x32xbf16>
    %111 = vector.shape_cast %110 : vector<1x4x32xbf16> to vector<4x32xbf16>
    %cst_74 = arith.constant dense<0.000000e+00> : vector<8x32xf32>
    %112 = tpu.matmul %109, %111, %cst_74 {dimension_numbers = #tpu.dot_dimension_numbers<[1], [0], [0], [1], [0, 0, 1, 1], [], []>} : vector<8x4xbf16>, vector<4x32xbf16>, vector<8x32xf32> -> vector<8x32xf32>
    %113 = arith.addf %104, %112 : vector<8x32xf32>
    %114 = tpu.concatenate %29, %57, %85, %113 in 1 : vector<8x32xf32>, vector<8x32xf32>, vector<8x32xf32>, vector<8x32xf32> -> vector<8x128xf32>
    %c0_75 = arith.constant 0 : index
    %c0_76 = arith.constant 0 : index
    %115 = vector.load %arg4[%c0_75, %c0_76] : memref<1x128xf32, #tpu.memory_space<vmem>>, vector<1x128xf32>
    %116 = vector.broadcast %115 : vector<1x128xf32> to vector<8x128xf32>
    %117 = arith.addf %114, %116 : vector<8x128xf32>
    %c0_77 = arith.constant 0 : index
    %c0_78 = arith.constant 0 : index
    %c0_79 = arith.constant 0 : index
    %118 = vector.load %arg5[%c0_77, %c0_78, %c0_79] : memref<1x8x128xf32, #tpu.memory_space<vmem>>, vector<1x8x128xf32>
    %119 = vector.shape_cast %118 : vector<1x8x128xf32> to vector<8x128xf32>
    %120 = vector.shape_cast %117 : vector<8x128xf32> to vector<1x8x128xf32>
    tpu.vector_store %arg5[%c0_77, %c0_78, %c0_79], %120 {strides = array<i32>} : memref<1x8x128xf32, #tpu.memory_space<vmem>>, vector<1x8x128xf32>,
    return
  }
  func.func @transform_0(%arg0: i32, %arg1: i32) -> (i32, i32, i32) {
    %c0_i32 = arith.constant 0 : i32
    %c0_i32_0 = arith.constant 0 : i32
    %c0_i32_1 = arith.constant 0 : i32
    return %arg0, %c0_i32, %c0_i32_0 : i32, i32, i32
  }
  func.func @transform_1(%arg0: i32, %arg1: i32) -> (i32, i32, i32) {
    %c0_i32 = arith.constant 0 : i32
    %c0_i32_0 = arith.constant 0 : i32
    %c0_i32_1 = arith.constant 0 : i32
    %c0_i32_2 = arith.constant 0 : i32
    return %c0_i32, %c0_i32_0, %c0_i32_1 : i32, i32, i32
  }
  func.func @transform_2(%arg0: i32, %arg1: i32) -> (i32, i32) {
    %c0_i32 = arith.constant 0 : i32
    %c0_i32_0 = arith.constant 0 : i32
    %c0_i32_1 = arith.constant 0 : i32
    return %c0_i32, %c0_i32_0 : i32, i32
  }
  func.func @transform_3(%arg0: i32, %arg1: i32) -> (i32, i32, i32) {
    %c0_i32 = arith.constant 0 : i32
    %c0_i32_0 = arith.constant 0 : i32
    return %arg0, %arg1, %c0_i32 : i32, i32, i32
  }
}

</mosaic_0001>

<llo_original>
// kernel: conv1d_embedding.1
$region0: #{conv1d_embedding.1}
  #allocation0 [shape = 'u32[]', space=smem, size = 0x4, offset = 0x4, fixed_abs, tag = 'smem constant byte address 0x4 - core index']
  #allocation1 [shape = 'u32[144,128]{1,0:T(1,128)}', space=vmem, size = 0x12000, scoped, tag = 'internal scratch']
  %s0 = inlined_call_operand.vmem [shape: f32[2,9,32], index: 0, kind: input, shape index: {}]
  %s1 = inlined_call_operand.vmem [shape: bf16[3,4,32], index: 1, kind: input, shape index: {}]
  %s2 = inlined_call_operand.vmem [shape: f32[1,128], index: 2, kind: input, shape index: {}]
  %s3 = inlined_call_operand.vmem [shape: f32[2,8,128], index: 3, kind: output, shape index: {}]
  %s4 = sld [smem:[#allocation0]]
  $region45: #{conv1d_embedding.1} parent=0
    _
  %s6 = ssub.s32 1, %s4
  %s7 = scalar_select 0, %s6, %s4
  loop: start=0, step=1, limit=4
  $region2: #{conv1d_embedding.1} parent=0 // loop_pre_header
    _
  $region3: #{conv1d_embedding.1} parent=0 // loop_header
    %s9 = sphi 0, %s13
    %p10 = scmp.ge.s32.totalorder %s9, 4
    %s16 = sphi 0, %s28
    %s17 = sphi 0, %s24
    %s18 = sphi 0, %s16
    %s19 = sphi 0, %s17
    %s20 = sphi 0, %s18
    %s21 = sphi 0, %s19
    %s31 = sphi 0, %s33
    %s34 = sphi 0, %s31
    %s35 = sphi 0, %s34
    %s51 = sphi 0, %s35
    %s55 = sphi 0, %s55
    %s57 = sphi 0, %s55
    %s58 = sphi 0, %s57
    %s72 = sphi 0, %s58
    %s76 = sphi 0, %s76
    %s78 = sphi 0, %s76
    %s79 = sphi 0, %s78
    %s93 = sphi 0, %s79
    %s101 = sphi 0, %s103
    %s104 = sphi 0, %s101
    %s105 = sphi 0, %s104
    %s121 = sphi 0, %s105
  $region4: #{conv1d_embedding.1} parent=0 // loop_header_branch
    %12 = sbr.rel (%p10) target = $region8
  $region5: #{conv1d_embedding.1} parent=0 // loop_body
    %s14 = ssub.s32 %s9, 1
    %s15 = ssub.s32 %s9, 2
    %s22 = sadd.s32 1, %s17
    %p23 = scmp.ge.s32.totalorder %s22, 1
    %s24 = scalar_select %p23, 0, %s22
    %s25 = sadd.s32 1, %s16
    %s26 = scalar_select %p23, %s25, %s16
    %p27 = scmp.ge.s32.totalorder %s26, 2
    %s28 = scalar_select %p27, 0, %s26
    %s29 = ssub.s32 %s16, %s28
    %p30 = scmp.eq.s32.totalorder %s29, 0
    %s32 = sadd.s32 %s31, 1
    %s33 = scalar_select %p30, %s31, %s32
    %p36 = pneg %p30
    %p37 = scmp.eq.s32.totalorder %s9, 1
    %p38 = por %p36, %p37
    %p39 = scmp.ne.s32.totalorder %s31, %s34
    %p40 = scmp.eq.s32.totalorder %s9, 0
    %p41 = por %p39, %p40
    %p42 = scmp.ne.s32.totalorder %s31, %s34
    %p43 = scmp.eq.s32.totalorder %s14, 1
    %p44 = por %p42, %p43
    %p45 = scmp.ne.s32.totalorder %s34, %s35
    %p46 = scmp.eq.s32.totalorder %s14, 0
    %p47 = por %p45, %p46
    %p48 = scmp.ne.s32.totalorder %s34, %s35
    %p49 = scmp.eq.s32.totalorder %s15, 1
    %p50 = por %p48, %p49
    %p52 = scmp.ne.s32.totalorder %s35, %s51
    %p53 = scmp.eq.s32.totalorder %s15, 0
    %p54 = por %p52, %p53
    %s56 = sadd.s32 %s55, 1
    %p59 = scmp.eq.s32.totalorder %s9, 1
    %p60 = scmp.ne.s32.totalorder %s55, %s57
    %p61 = scmp.eq.s32.totalorder %s9, 0
    %p62 = por %p60, %p61
    %p63 = scmp.ne.s32.totalorder %s55, %s57
    %p64 = scmp.eq.s32.totalorder %s14, 1
    %p65 = por %p63, %p64
    %p66 = scmp.ne.s32.totalorder %s57, %s58
    %p67 = scmp.eq.s32.totalorder %s14, 0
    %p68 = por %p66, %p67
    %p69 = scmp.ne.s32.totalorder %s57, %s58
    %p70 = scmp.eq.s32.totalorder %s15, 1
    %p71 = por %p69, %p70
    %p73 = scmp.ne.s32.totalorder %s58, %s72
    %p74 = scmp.eq.s32.totalorder %s15, 0
    %p75 = por %p73, %p74
    %s77 = sadd.s32 %s76, 1
    %p80 = scmp.eq.s32.totalorder %s9, 1
    %p81 = scmp.ne.s32.totalorder %s76, %s78
    %p82 = scmp.eq.s32.totalorder %s9, 0
    %p83 = por %p81, %p82
    %p84 = scmp.ne.s32.totalorder %s76, %s78
    %p85 = scmp.eq.s32.totalorder %s14, 1
    %p86 = por %p84, %p85
    %p87 = scmp.ne.s32.totalorder %s78, %s79
    %p88 = scmp.eq.s32.totalorder %s14, 0
    %p89 = por %p87, %p88
    %p90 = scmp.ne.s32.totalorder %s78, %s79
    %p91 = scmp.eq.s32.totalorder %s15, 1
    %p92 = por %p90, %p91
    %p94 = scmp.ne.s32.totalorder %s79, %s93
    %p95 = scmp.eq.s32.totalorder %s15, 0
    %p96 = por %p94, %p95
    %s97 = ssub.s32 %s16, %s28
    %s98 = ssub.s32 %s17, %s24
    %s99 = sor.u32 %s97, %s98
    %p100 = scmp.eq.s32.totalorder %s99, 0
    %s102 = sadd.s32 %s101, 1
    %s103 = scalar_select %p100, %s101, %s102
    %p106 = pneg %p100
    %p107 = scmp.eq.s32.totalorder %s9, 1
    %p108 = por %p106, %p107
    %p109 = scmp.ne.s32.totalorder %s101, %s104
    %p110 = scmp.eq.s32.totalorder %s9, 0
    %p111 = por %p109, %p110
    %p112 = scmp.ne.s32.totalorder %s101, %s104
    %p113 = scmp.eq.s32.totalorder %s14, 1
    %p114 = por %p112, %p113
    %p115 = scmp.ne.s32.totalorder %s104, %s105
    %p116 = scmp.eq.s32.totalorder %s14, 0
    %p117 = por %p115, %p116
    %p118 = scmp.ne.s32.totalorder %s104, %s105
    %p119 = scmp.eq.s32.totalorder %s15, 1
    %p120 = por %p118, %p119
    %p122 = scmp.ne.s32.totalorder %s105, %s121
    %p123 = scmp.eq.s32.totalorder %s15, 0
    %p124 = por %p122, %p123
    %p125 = scmp.le.s32.totalorder 1, %s9
    %p126 = scmp.lt.s32.totalorder %s9, 3
    %p127 = pnand %p125, %p126
    %p128 = pneg %p127
    // Predicated region
    $region9: #{conv1d_embedding.1} parent=5 // pred_check
      _
    $region10: #{conv1d_embedding.1} parent=5 // pred_check_branch
      %130 = sbr.rel (%p127) target = $region12
    $region11: #{conv1d_embedding.1} parent=5 // pred_region
      %s131 = ssub.s32 %s9, 1
      // Predicated region
      $region13: #{conv1d_embedding.1} parent=11 // pred_check
        %p132 = pneg %p68
      $region14: #{conv1d_embedding.1} parent=11 // pred_check_branch
        %134 = sbr.rel (%p132) target = $region16
      $region15: #{conv1d_embedding.1} parent=11 // pred_region
        _
      $region16: #{conv1d_embedding.1} parent=11 // pred_fallthru
        _
      // Predicated region
      $region17: #{conv1d_embedding.1} parent=11 // pred_check
        %p135 = pneg %p89
      $region18: #{conv1d_embedding.1} parent=11 // pred_check_branch
        %137 = sbr.rel (%p135) target = $region20
      $region19: #{conv1d_embedding.1} parent=11 // pred_region
        _
      $region20: #{conv1d_embedding.1} parent=11 // pred_fallthru
        _
    $region12: #{conv1d_embedding.1} parent=5 // pred_fallthru
      _
    %p138 = scmp.lt.s32.totalorder %s9, 2
    // Predicated region
    $region21: #{conv1d_embedding.1} parent=5 // pred_check
      %p139 = pneg %p138
    $region22: #{conv1d_embedding.1} parent=5 // pred_check_branch
      %141 = sbr.rel (%p139) target = $region24
    $region23: #{conv1d_embedding.1} parent=5 // pred_region
      // Predicated region
      $region25: #{conv1d_embedding.1} parent=23 // pred_check
        %p142 = pneg %p41
      $region26: #{conv1d_embedding.1} parent=23 // pred_check_branch
        %144 = sbr.rel (%p142) target = $region28
      $region27: #{conv1d_embedding.1} parent=23 // pred_region
        %p145 = scmp.lt.s32.totalorder %s16, 1
        %s146 = scalar_select %p145, %s16, 1
        %s147 = smul.addr %s146, 2
        %s148 = smul.addr %s147, 8
        %s149 = scalar_lea.vmem %s0, %s148
      $region28: #{conv1d_embedding.1} parent=23 // pred_fallthru
        _
    $region24: #{conv1d_embedding.1} parent=5 // pred_fallthru
      _
    %p150 = scmp.le.s32.totalorder 1, %s9
    %p151 = scmp.lt.s32.totalorder %s9, 3
    %p152 = pnand %p150, %p151
    %p153 = pneg %p152
    // Predicated region
    $region29: #{conv1d_embedding.1} parent=5 // pred_check
      _
    $region30: #{conv1d_embedding.1} parent=5 // pred_check_branch
      %155 = sbr.rel (%p152) target = $region32
    $region31: #{conv1d_embedding.1} parent=5 // pred_region
      %s156 = ssub.s32 %s9, 1
      %p157 = scmp.lt.s32.totalorder %s18, 1
      %s158 = scalar_select %p157, %s18, 1
      %s159 = smul.addr %s158, 2
      %s160 = smul.addr %s159, 8
      %s161 = scalar_lea.vmem %s0, %s160
      %p162 = pneg %p47
      %p163 = pneg %p44
      %p164 = pneg %p68
      %p165 = pneg %p65
      %p166 = pneg %p89
      %p167 = pneg %p86
      %p168 = pneg %p117
      %p169 = pneg %p114
      %p170 = scmp.lt.s32.totalorder %s18, 1
      %s171 = scalar_select %p170, %s18, 1
      %p172 = scmp.lt.s32.totalorder %s19, 0
      %s173 = scalar_select %p172, %s19, 0
      %s174 = sadd.s32 %s173, %s171
      %s175 = smul.addr %s174, 8
      %s176 = scalar_lea.vmem %s3, %s175
      %p177 = scmp.lt.s32.totalorder %s18, 1
      %s178 = scalar_select %p177, %s18, 1
      %s179 = smul.addr %s178, 2
      %s180 = smul.addr %s179, 8
      %s181 = scalar_lea.vmem %s0, %s180
      %p182 = scmp.lt.s32.totalorder %s18, 1
      %s183 = scalar_select %p182, %s18, 1
      %p184 = scmp.lt.s32.totalorder %s19, 0
      %s185 = scalar_select %p184, %s19, 0
      %s186 = sadd.s32 %s185, %s183
      %s187 = smul.addr %s186, 8
      %s188 = scalar_lea.vmem %s3, %s187
      %s190 = smul.u32 %s19, 8
      %s191 = scalar_lea.vmem %s181, %s190
      %v192 = vld [vmem:[%s191] sm:$0xff]
      %v193 = vpack.c.bf16 %v192, %v192
      %v194 = vld [vmem:[%s1] sm:$0x3]
      %s195 = scalar_lea.vmem %s1, 2
      %v196 = vld [vmem:[%s195] sm:$0x3]
      %198 = vrot.lane.b32.xlu0 %v193, 124
      %v199 = vpop.permute.xlu0 %198
      %vm200 = vcmask 31744
      %v202 = vsel %vm200, %v199, 0
      %vm204 = vcmask 1041408
      %v206 = vsel %vm204, %v196, 0
      %208 = vmatprep.subr.bf16.mxu0 0
      %209 = vmatpush1.bf16.msra.mxu0 %v206
      %210 = vmatprep.subr.bf16.mxu0 0
      %211 = vmatpush1.bf16.msra.mxu0 0
      %212 = vmatprep.subr.bf16.mxu0 0
      %213 = vmatpush1.bf16.msra.mxu0 0
      %214 = vmatprep.subr.bf16.mxu0 0
      %215 = vmatpush1.bf16.msra.mxu0 0
      %216 = vmatprep.subr.bf16.mxu0 0
      %217 = vmatpush1.bf16.msra.mxu0 0
      %218 = vmatprep.subr.bf16.mxu0 0
      %219 = vmatpush1.bf16.msra.mxu0 0
      %220 = vmatprep.subr.bf16.mxu0 0
      %221 = vmatpush1.bf16.msra.mxu0 0
      %222 = vmatprep.subr.bf16.mxu0 0
      %223 = vmatpush1.bf16.msra.mxu0 0
      %224 = vmatprep.subr.bf16.mxu0 0
      %225 = vmatpush1.bf16.msra.mxu0 0
      %226 = vmatprep.subr.bf16.mxu0 0
      %227 = vmatpush1.bf16.msra.mxu0 0
      %228 = vmatprep.subr.bf16.mxu0 0
      %229 = vmatpush1.bf16.msra.mxu0 0
      %230 = vmatprep.subr.bf16.mxu0 0
      %231 = vmatpush1.bf16.msra.mxu0 0
      %232 = vmatprep.subr.bf16.mxu0 0
      %233 = vmatpush1.bf16.msra.mxu0 0
      %234 = vmatprep.subr.bf16.mxu0 0
      %235 = vmatpush1.bf16.msra.mxu0 0
      %236 = vmatprep.subr.bf16.mxu0 0
      %237 = vmatpush1.bf16.msra.mxu0 0
      %238 = vmatprep.subr.bf16.mxu0 0
      %239 = vmatpush1.bf16.msra.mxu0 0
      %240 = vmatprep.mubr.bf16.mxu0 0
      %241 = vmatmul.mubr.bf16.gmra.mrb[0].mxu0 %v202
      %v242 = vpop.f32.mrb[0].mxu0
      %v243 = vadd.f32 0.0, %v242
      %v244 = vpop.f32.mrb[0].mxu0
      %v245 = vpop.f32.mrb[0].mxu0
      %v246 = vpop.f32.mrb[0].mxu0
      %247 = vdwg.mxu0
      %v249 = vsel %vm200, %v193, 0
      %v252 = vsel %vm204, %v194, 0
      %254 = vmatprep.subr.bf16.mxu0 0
      %255 = vmatpush1.bf16.msra.mxu0 %v252
      %256 = vmatprep.subr.bf16.mxu0 0
      %257 = vmatpush1.bf16.msra.mxu0 0
      %258 = vmatprep.subr.bf16.mxu0 0
      %259 = vmatpush1.bf16.msra.mxu0 0
      %260 = vmatprep.subr.bf16.mxu0 0
      %261 = vmatpush1.bf16.msra.mxu0 0
      %262 = vmatprep.subr.bf16.mxu0 0
      %263 = vmatpush1.bf16.msra.mxu0 0
      %264 = vmatprep.subr.bf16.mxu0 0
      %265 = vmatpush1.bf16.msra.mxu0 0
      %266 = vmatprep.subr.bf16.mxu0 0
      %267 = vmatpush1.bf16.msra.mxu0 0
      %268 = vmatprep.subr.bf16.mxu0 0
      %269 = vmatpush1.bf16.msra.mxu0 0
      %270 = vmatprep.subr.bf16.mxu0 0
      %271 = vmatpush1.bf16.msra.mxu0 0
      %272 = vmatprep.subr.bf16.mxu0 0
      %273 = vmatpush1.bf16.msra.mxu0 0
      %274 = vmatprep.subr.bf16.mxu0 0
      %275 = vmatpush1.bf16.msra.mxu0 0
      %276 = vmatprep.subr.bf16.mxu0 0
      %277 = vmatpush1.bf16.msra.mxu0 0
      %278 = vmatprep.subr.bf16.mxu0 0
      %279 = vmatpush1.bf16.msra.mxu0 0
      %280 = vmatprep.subr.bf16.mxu0 0
      %281 = vmatpush1.bf16.msra.mxu0 0
      %282 = vmatprep.subr.bf16.mxu0 0
      %283 = vmatpush1.bf16.msra.mxu0 0
      %284 = vmatprep.subr.bf16.mxu0 0
      %285 = vmatpush1.bf16.msra.mxu0 0
      %286 = vmatprep.mubr.bf16.mxu0 0
      %287 = vmatmul.mubr.bf16.gmra.mrb[0].mxu0 %v249
      %v288 = vpop.f32.mrb[0].mxu0
      %v289 = vadd.f32 %v243, %v288
      %v290 = vpop.f32.mrb[0].mxu0
      %v291 = vpop.f32.mrb[0].mxu0
      %v292 = vpop.f32.mrb[0].mxu0
      %293 = vdwg.mxu0
      %s294 = scalar_lea.vmem %s1, 4
      %v295 = vld [vmem:[%s294] sm:$0x3]
      %296 = vrot.lane.b32.xlu0 %v193, 120
      %v297 = vpop.permute.xlu0 %296
      %v299 = vsel %vm200, %v297, 0
      %v302 = vsel %vm204, %v295, 0
      %304 = vmatprep.subr.bf16.mxu0 0
      %305 = vmatpush1.bf16.msra.mxu0 %v302
      %306 = vmatprep.subr.bf16.mxu0 0
      %307 = vmatpush1.bf16.msra.mxu0 0
      %308 = vmatprep.subr.bf16.mxu0 0
      %309 = vmatpush1.bf16.msra.mxu0 0
      %310 = vmatprep.subr.bf16.mxu0 0
      %311 = vmatpush1.bf16.msra.mxu0 0
      %312 = vmatprep.subr.bf16.mxu0 0
      %313 = vmatpush1.bf16.msra.mxu0 0
      %314 = vmatprep.subr.bf16.mxu0 0
      %315 = vmatpush1.bf16.msra.mxu0 0
      %316 = vmatprep.subr.bf16.mxu0 0
      %317 = vmatpush1.bf16.msra.mxu0 0
      %318 = vmatprep.subr.bf16.mxu0 0
      %319 = vmatpush1.bf16.msra.mxu0 0
      %320 = vmatprep.subr.bf16.mxu0 0
      %321 = vmatpush1.bf16.msra.mxu0 0
      %322 = vmatprep.subr.bf16.mxu0 0
      %323 = vmatpush1.bf16.msra.mxu0 0
      %324 = vmatprep.subr.bf16.mxu0 0
      %325 = vmatpush1.bf16.msra.mxu0 0
      %326 = vmatprep.subr.bf16.mxu0 0
      %327 = vmatpush1.bf16.msra.mxu0 0
      %328 = vmatprep.subr.bf16.mxu0 0
      %329 = vmatpush1.bf16.msra.mxu0 0
      %330 = vmatprep.subr.bf16.mxu0 0
      %331 = vmatpush1.bf16.msra.mxu0 0
      %332 = vmatprep.subr.bf16.mxu0 0
      %333 = vmatpush1.bf16.msra.mxu0 0
      %334 = vmatprep.subr.bf16.mxu0 0
      %335 = vmatpush1.bf16.msra.mxu0 0
      %336 = vmatprep.mubr.bf16.mxu0 0
      %337 = vmatmul.mubr.bf16.gmra.mrb[0].mxu0 %v299
      %v338 = vpop.f32.mrb[0].mxu0
      %v339 = vadd.f32 0.0, %v338
      %v340 = vpop.f32.mrb[0].mxu0
      %v341 = vpop.f32.mrb[0].mxu0
      %v342 = vpop.f32.mrb[0].mxu0
      %343 = vdwg.mxu0
      %v344 = vadd.f32 %v289, %v339
      %345 = vrot.lane.b32.xlu0 %v193, 116
      %v346 = vpop.permute.xlu0 %345
      %v348 = vsel %vm200, %v346, 0
      %350 = vmatprep.subr.bf16.mxu0 0
      %351 = vmatpush1.bf16.msra.mxu0 %v206
      %352 = vmatprep.subr.bf16.mxu0 0
      %353 = vmatpush1.bf16.msra.mxu0 0
      %354 = vmatprep.subr.bf16.mxu0 0
      %355 = vmatpush1.bf16.msra.mxu0 0
      %356 = vmatprep.subr.bf16.mxu0 0
      %357 = vmatpush1.bf16.msra.mxu0 0
      %358 = vmatprep.subr.bf16.mxu0 0
      %359 = vmatpush1.bf16.msra.mxu0 0
      %360 = vmatprep.subr.bf16.mxu0 0
      %361 = vmatpush1.bf16.msra.mxu0 0
      %362 = vmatprep.subr.bf16.mxu0 0
      %363 = vmatpush1.bf16.msra.mxu0 0
      %364 = vmatprep.subr.bf16.mxu0 0
      %365 = vmatpush1.bf16.msra.mxu0 0
      %366 = vmatprep.subr.bf16.mxu0 0
      %367 = vmatpush1.bf16.msra.mxu0 0
      %368 = vmatprep.subr.bf16.mxu0 0
      %369 = vmatpush1.bf16.msra.mxu0 0
      %370 = vmatprep.subr.bf16.mxu0 0
      %371 = vmatpush1.bf16.msra.mxu0 0
      %372 = vmatprep.subr.bf16.mxu0 0
      %373 = vmatpush1.bf16.msra.mxu0 0
      %374 = vmatprep.subr.bf16.mxu0 0
      %375 = vmatpush1.bf16.msra.mxu0 0
      %376 = vmatprep.subr.bf16.mxu0 0
      %377 = vmatpush1.bf16.msra.mxu0 0
      %378 = vmatprep.subr.bf16.mxu0 0
      %379 = vmatpush1.bf16.msra.mxu0 0
      %380 = vmatprep.subr.bf16.mxu0 0
      %381 = vmatpush1.bf16.msra.mxu0 0
      %382 = vmatprep.mubr.bf16.mxu0 0
      %383 = vmatmul.mubr.bf16.gmra.mrb[0].mxu0 %v348
      %v384 = vpop.f32.mrb[0].mxu0
      %v385 = vadd.f32 0.0, %v384
      %v386 = vpop.f32.mrb[0].mxu0
      %v387 = vpop.f32.mrb[0].mxu0
      %v388 = vpop.f32.mrb[0].mxu0
      %389 = vdwg.mxu0
      %390 = vmatprep.subr.bf16.mxu0 0
      %391 = vmatpush1.bf16.msra.mxu0 %v252
      %392 = vmatprep.subr.bf16.mxu0 0
      %393 = vmatpush1.bf16.msra.mxu0 0
      %394 = vmatprep.subr.bf16.mxu0 0
      %395 = vmatpush1.bf16.msra.mxu0 0
      %396 = vmatprep.subr.bf16.mxu0 0
      %397 = vmatpush1.bf16.msra.mxu0 0
      %398 = vmatprep.subr.bf16.mxu0 0
      %399 = vmatpush1.bf16.msra.mxu0 0
      %400 = vmatprep.subr.bf16.mxu0 0
      %401 = vmatpush1.bf16.msra.mxu0 0
      %402 = vmatprep.subr.bf16.mxu0 0
      %403 = vmatpush1.bf16.msra.mxu0 0
      %404 = vmatprep.subr.bf16.mxu0 0
      %405 = vmatpush1.bf16.msra.mxu0 0
      %406 = vmatprep.subr.bf16.mxu0 0
      %407 = vmatpush1.bf16.msra.mxu0 0
      %408 = vmatprep.subr.bf16.mxu0 0
      %409 = vmatpush1.bf16.msra.mxu0 0
      %410 = vmatprep.subr.bf16.mxu0 0
      %411 = vmatpush1.bf16.msra.mxu0 0
      %412 = vmatprep.subr.bf16.mxu0 0
      %413 = vmatpush1.bf16.msra.mxu0 0
      %414 = vmatprep.subr.bf16.mxu0 0
      %415 = vmatpush1.bf16.msra.mxu0 0
      %416 = vmatprep.subr.bf16.mxu0 0
      %417 = vmatpush1.bf16.msra.mxu0 0
      %418 = vmatprep.subr.bf16.mxu0 0
      %419 = vmatpush1.bf16.msra.mxu0 0
      %420 = vmatprep.subr.bf16.mxu0 0
      %421 = vmatpush1.bf16.msra.mxu0 0
      %422 = vmatprep.mubr.bf16.mxu0 0
      %423 = vmatmul.mubr.bf16.gmra.mrb[0].mxu0 %v299
      %v424 = vpop.f32.mrb[0].mxu0
      %v425 = vadd.f32 %v385, %v424
      %v426 = vpop.f32.mrb[0].mxu0
      %v427 = vpop.f32.mrb[0].mxu0
      %v428 = vpop.f32.mrb[0].mxu0
      %429 = vdwg.mxu0
      %430 = vrot.lane.b32.xlu0 %v193, 112
      %v431 = vpop.permute.xlu0 %430
      %v433 = vsel %vm200, %v431, 0
      %435 = vmatprep.subr.bf16.mxu0 0
      %436 = vmatpush1.bf16.msra.mxu0 %v302
      %437 = vmatprep.subr.bf16.mxu0 0
      %438 = vmatpush1.bf16.msra.mxu0 0
      %439 = vmatprep.subr.bf16.mxu0 0
      %440 = vmatpush1.bf16.msra.mxu0 0
      %441 = vmatprep.subr.bf16.mxu0 0
      %442 = vmatpush1.bf16.msra.mxu0 0
      %443 = vmatprep.subr.bf16.mxu0 0
      %444 = vmatpush1.bf16.msra.mxu0 0
      %445 = vmatprep.subr.bf16.mxu0 0
      %446 = vmatpush1.bf16.msra.mxu0 0
      %447 = vmatprep.subr.bf16.mxu0 0
      %448 = vmatpush1.bf16.msra.mxu0 0
      %449 = vmatprep.subr.bf16.mxu0 0
      %450 = vmatpush1.bf16.msra.mxu0 0
      %451 = vmatprep.subr.bf16.mxu0 0
      %452 = vmatpush1.bf16.msra.mxu0 0
      %453 = vmatprep.subr.bf16.mxu0 0
      %454 = vmatpush1.bf16.msra.mxu0 0
      %455 = vmatprep.subr.bf16.mxu0 0
      %456 = vmatpush1.bf16.msra.mxu0 0
      %457 = vmatprep.subr.bf16.mxu0 0
      %458 = vmatpush1.bf16.msra.mxu0 0
      %459 = vmatprep.subr.bf16.mxu0 0
      %460 = vmatpush1.bf16.msra.mxu0 0
      %461 = vmatprep.subr.bf16.mxu0 0
      %462 = vmatpush1.bf16.msra.mxu0 0
      %463 = vmatprep.subr.bf16.mxu0 0
      %464 = vmatpush1.bf16.msra.mxu0 0
      %465 = vmatprep.subr.bf16.mxu0 0
      %466 = vmatpush1.bf16.msra.mxu0 0
      %467 = vmatprep.mubr.bf16.mxu0 0
      %468 = vmatmul.mubr.bf16.gmra.mrb[0].mxu0 %v433
      %v469 = vpop.f32.mrb[0].mxu0
      %v470 = vadd.f32 0.0, %v469
      %v471 = vpop.f32.mrb[0].mxu0
      %v472 = vpop.f32.mrb[0].mxu0
      %v473 = vpop.f32.mrb[0].mxu0
      %474 = vdwg.mxu0
      %v475 = vadd.f32 %v425, %v470
      %476 = vrot.lane.b32.xlu0 %v193, 108
      %v477 = vpop.permute.xlu0 %476
      %v479 = vsel %vm200, %v477, 0
      %481 = vmatprep.subr.bf16.mxu0 0
      %482 = vmatpush1.bf16.msra.mxu0 %v206
      %483 = vmatprep.subr.bf16.mxu0 0
      %484 = vmatpush1.bf16.msra.mxu0 0
      %485 = vmatprep.subr.bf16.mxu0 0
      %486 = vmatpush1.bf16.msra.mxu0 0
      %487 = vmatprep.subr.bf16.mxu0 0
      %488 = vmatpush1.bf16.msra.mxu0 0
      %489 = vmatprep.subr.bf16.mxu0 0
      %490 = vmatpush1.bf16.msra.mxu0 0
      %491 = vmatprep.subr.bf16.mxu0 0
      %492 = vmatpush1.bf16.msra.mxu0 0
      %493 = vmatprep.subr.bf16.mxu0 0
      %494 = vmatpush1.bf16.msra.mxu0 0
      %495 = vmatprep.subr.bf16.mxu0 0
      %496 = vmatpush1.bf16.msra.mxu0 0
      %497 = vmatprep.subr.bf16.mxu0 0
      %498 = vmatpush1.bf16.msra.mxu0 0
      %499 = vmatprep.subr.bf16.mxu0 0
      %500 = vmatpush1.bf16.msra.mxu0 0
      %501 = vmatprep.subr.bf16.mxu0 0
      %502 = vmatpush1.bf16.msra.mxu0 0
      %503 = vmatprep.subr.bf16.mxu0 0
      %504 = vmatpush1.bf16.msra.mxu0 0
      %505 = vmatprep.subr.bf16.mxu0 0
      %506 = vmatpush1.bf16.msra.mxu0 0
      %507 = vmatprep.subr.bf16.mxu0 0
      %508 = vmatpush1.bf16.msra.mxu0 0
      %509 = vmatprep.subr.bf16.mxu0 0
      %510 = vmatpush1.bf16.msra.mxu0 0
      %511 = vmatprep.subr.bf16.mxu0 0
      %512 = vmatpush1.bf16.msra.mxu0 0
      %513 = vmatprep.mubr.bf16.mxu0 0
      %514 = vmatmul.mubr.bf16.gmra.mrb[0].mxu0 %v479
      %v515 = vpop.f32.mrb[0].mxu0
      %v516 = vadd.f32 0.0, %v515
      %v517 = vpop.f32.mrb[0].mxu0
      %v518 = vpop.f32.mrb[0].mxu0
      %v519 = vpop.f32.mrb[0].mxu0
      %520 = vdwg.mxu0
      %521 = vmatprep.subr.bf16.mxu0 0
      %522 = vmatpush1.bf16.msra.mxu0 %v252
      %523 = vmatprep.subr.bf16.mxu0 0
      %524 = vmatpush1.bf16.msra.mxu0 0
      %525 = vmatprep.subr.bf16.mxu0 0
      %526 = vmatpush1.bf16.msra.mxu0 0
      %527 = vmatprep.subr.bf16.mxu0 0
      %528 = vmatpush1.bf16.msra.mxu0 0
      %529 = vmatprep.subr.bf16.mxu0 0
      %530 = vmatpush1.bf16.msra.mxu0 0
      %531 = vmatprep.subr.bf16.mxu0 0
      %532 = vmatpush1.bf16.msra.mxu0 0
      %533 = vmatprep.subr.bf16.mxu0 0
      %534 = vmatpush1.bf16.msra.mxu0 0
      %535 = vmatprep.subr.bf16.mxu0 0
      %536 = vmatpush1.bf16.msra.mxu0 0
      %537 = vmatprep.subr.bf16.mxu0 0
      %538 = vmatpush1.bf16.msra.mxu0 0
      %539 = vmatprep.subr.bf16.mxu0 0
      %540 = vmatpush1.bf16.msra.mxu0 0
      %541 = vmatprep.subr.bf16.mxu0 0
      %542 = vmatpush1.bf16.msra.mxu0 0
      %543 = vmatprep.subr.bf16.mxu0 0
      %544 = vmatpush1.bf16.msra.mxu0 0
      %545 = vmatprep.subr.bf16.mxu0 0
      %546 = vmatpush1.bf16.msra.mxu0 0
      %547 = vmatprep.subr.bf16.mxu0 0
      %548 = vmatpush1.bf16.msra.mxu0 0
      %549 = vmatprep.subr.bf16.mxu0 0
      %550 = vmatpush1.bf16.msra.mxu0 0
      %551 = vmatprep.subr.bf16.mxu0 0
      %552 = vmatpush1.bf16.msra.mxu0 0
      %553 = vmatprep.mubr.bf16.mxu0 0
      %554 = vmatmul.mubr.bf16.gmra.mrb[0].mxu0 %v433
      %v555 = vpop.f32.mrb[0].mxu0
      %v556 = vadd.f32 %v516, %v555
      %v557 = vpop.f32.mrb[0].mxu0
      %v558 = vpop.f32.mrb[0].mxu0
      %v559 = vpop.f32.mrb[0].mxu0
      %560 = vdwg.mxu0
      %561 = vrot.lane.b32.xlu0 %v193, 104
      %v562 = vpop.permute.xlu0 %561
      %v564 = vsel %vm200, %v562, 0
      %566 = vmatprep.subr.bf16.mxu0 0
      %567 = vmatpush1.bf16.msra.mxu0 %v302
      %568 = vmatprep.subr.bf16.mxu0 0
      %569 = vmatpush1.bf16.msra.mxu0 0
      %570 = vmatprep.subr.bf16.mxu0 0
      %571 = vmatpush1.bf16.msra.mxu0 0
      %572 = vmatprep.subr.bf16.mxu0 0
      %573 = vmatpush1.bf16.msra.mxu0 0
      %574 = vmatprep.subr.bf16.mxu0 0
      %575 = vmatpush1.bf16.msra.mxu0 0
      %576 = vmatprep.subr.bf16.mxu0 0
      %577 = vmatpush1.bf16.msra.mxu0 0
      %578 = vmatprep.subr.bf16.mxu0 0
      %579 = vmatpush1.bf16.msra.mxu0 0
      %580 = vmatprep.subr.bf16.mxu0 0
      %581 = vmatpush1.bf16.msra.mxu0 0
      %582 = vmatprep.subr.bf16.mxu0 0
      %583 = vmatpush1.bf16.msra.mxu0 0
      %584 = vmatprep.subr.bf16.mxu0 0
      %585 = vmatpush1.bf16.msra.mxu0 0
      %586 = vmatprep.subr.bf16.mxu0 0
      %587 = vmatpush1.bf16.msra.mxu0 0
      %588 = vmatprep.subr.bf16.mxu0 0
      %589 = vmatpush1.bf16.msra.mxu0 0
      %590 = vmatprep.subr.bf16.mxu0 0
      %591 = vmatpush1.bf16.msra.mxu0 0
      %592 = vmatprep.subr.bf16.mxu0 0
      %593 = vmatpush1.bf16.msra.mxu0 0
      %594 = vmatprep.subr.bf16.mxu0 0
      %595 = vmatpush1.bf16.msra.mxu0 0
      %596 = vmatprep.subr.bf16.mxu0 0
      %597 = vmatpush1.bf16.msra.mxu0 0
      %598 = vmatprep.mubr.bf16.mxu0 0
      %599 = vmatmul.mubr.bf16.gmra.mrb[0].mxu0 %v564
      %v600 = vpop.f32.mrb[0].mxu0
      %v601 = vadd.f32 0.0, %v600
      %v602 = vpop.f32.mrb[0].mxu0
      %v603 = vpop.f32.mrb[0].mxu0
      %v604 = vpop.f32.mrb[0].mxu0
      %605 = vdwg.mxu0
      %v606 = vadd.f32 %v556, %v601
      %607 = vrot.lane.b32.xlu0 %v193, 100
      %v608 = vpop.permute.xlu0 %607
      %v610 = vsel %vm200, %v608, 0
      %612 = vmatprep.subr.bf16.mxu0 0
      %613 = vmatpush1.bf16.msra.mxu0 %v206
      %614 = vmatprep.subr.bf16.mxu0 0
      %615 = vmatpush1.bf16.msra.mxu0 0
      %616 = vmatprep.subr.bf16.mxu0 0
      %617 = vmatpush1.bf16.msra.mxu0 0
      %618 = vmatprep.subr.bf16.mxu0 0
      %619 = vmatpush1.bf16.msra.mxu0 0
      %620 = vmatprep.subr.bf16.mxu0 0
      %621 = vmatpush1.bf16.msra.mxu0 0
      %622 = vmatprep.subr.bf16.mxu0 0
      %623 = vmatpush1.bf16.msra.mxu0 0
      %624 = vmatprep.subr.bf16.mxu0 0
      %625 = vmatpush1.bf16.msra.mxu0 0
      %626 = vmatprep.subr.bf16.mxu0 0
      %627 = vmatpush1.bf16.msra.mxu0 0
      %628 = vmatprep.subr.bf16.mxu0 0
      %629 = vmatpush1.bf16.msra.mxu0 0
      %630 = vmatprep.subr.bf16.mxu0 0
      %631 = vmatpush1.bf16.msra.mxu0 0
      %632 = vmatprep.subr.bf16.mxu0 0
      %633 = vmatpush1.bf16.msra.mxu0 0
      %634 = vmatprep.subr.bf16.mxu0 0
      %635 = vmatpush1.bf16.msra.mxu0 0
      %636 = vmatprep.subr.bf16.mxu0 0
      %637 = vmatpush1.bf16.msra.mxu0 0
      %638 = vmatprep.subr.bf16.mxu0 0
      %639 = vmatpush1.bf16.msra.mxu0 0
      %640 = vmatprep.subr.bf16.mxu0 0
      %641 = vmatpush1.bf16.msra.mxu0 0
      %642 = vmatprep.subr.bf16.mxu0 0
      %643 = vmatpush1.bf16.msra.mxu0 0
      %644 = vmatprep.mubr.bf16.mxu0 0
      %645 = vmatmul.mubr.bf16.gmra.mrb[0].mxu0 %v610
      %v646 = vpop.f32.mrb[0].mxu0
      %v647 = vadd.f32 0.0, %v646
      %v648 = vpop.f32.mrb[0].mxu0
      %v649 = vpop.f32.mrb[0].mxu0
      %v650 = vpop.f32.mrb[0].mxu0
      %651 = vdwg.mxu0
      %652 = vmatprep.subr.bf16.mxu0 0
      %653 = vmatpush1.bf16.msra.mxu0 %v252
      %654 = vmatprep.subr.bf16.mxu0 0
      %655 = vmatpush1.bf16.msra.mxu0 0
      %656 = vmatprep.subr.bf16.mxu0 0
      %657 = vmatpush1.bf16.msra.mxu0 0
      %658 = vmatprep.subr.bf16.mxu0 0
      %659 = vmatpush1.bf16.msra.mxu0 0
      %660 = vmatprep.subr.bf16.mxu0 0
      %661 = vmatpush1.bf16.msra.mxu0 0
      %662 = vmatprep.subr.bf16.mxu0 0
      %663 = vmatpush1.bf16.msra.mxu0 0
      %664 = vmatprep.subr.bf16.mxu0 0
      %665 = vmatpush1.bf16.msra.mxu0 0
      %666 = vmatprep.subr.bf16.mxu0 0
      %667 = vmatpush1.bf16.msra.mxu0 0
      %668 = vmatprep.subr.bf16.mxu0 0
      %669 = vmatpush1.bf16.msra.mxu0 0
      %670 = vmatprep.subr.bf16.mxu0 0
      %671 = vmatpush1.bf16.msra.mxu0 0
      %672 = vmatprep.subr.bf16.mxu0 0
      %673 = vmatpush1.bf16.msra.mxu0 0
      %674 = vmatprep.subr.bf16.mxu0 0
      %675 = vmatpush1.bf16.msra.mxu0 0
      %676 = vmatprep.subr.bf16.mxu0 0
      %677 = vmatpush1.bf16.msra.mxu0 0
      %678 = vmatprep.subr.bf16.mxu0 0
      %679 = vmatpush1.bf16.msra.mxu0 0
      %680 = vmatprep.subr.bf16.mxu0 0
      %681 = vmatpush1.bf16.msra.mxu0 0
      %682 = vmatprep.subr.bf16.mxu0 0
      %683 = vmatpush1.bf16.msra.mxu0 0
      %684 = vmatprep.mubr.bf16.mxu0 0
      %685 = vmatmul.mubr.bf16.gmra.mrb[0].mxu0 %v564
      %v686 = vpop.f32.mrb[0].mxu0
      %v687 = vadd.f32 %v647, %v686
      %v688 = vpop.f32.mrb[0].mxu0
      %v689 = vpop.f32.mrb[0].mxu0
      %v690 = vpop.f32.mrb[0].mxu0
      %691 = vdwg.mxu0
      %s692 = sadd.s32 %s190, 1
      %s693 = scalar_lea.vmem %s181, %s692
      %v694 = vld [vmem:[%s693] sm:$0xff]
      %v695 = vpack.c.bf16 %v694, %v694
      %v697 = vsel %vm200, %v695, 0
      %699 = vmatprep.subr.bf16.mxu0 0
      %700 = vmatpush1.bf16.msra.mxu0 %v302
      %701 = vmatprep.subr.bf16.mxu0 0
      %702 = vmatpush1.bf16.msra.mxu0 0
      %703 = vmatprep.subr.bf16.mxu0 0
      %704 = vmatpush1.bf16.msra.mxu0 0
      %705 = vmatprep.subr.bf16.mxu0 0
      %706 = vmatpush1.bf16.msra.mxu0 0
      %707 = vmatprep.subr.bf16.mxu0 0
      %708 = vmatpush1.bf16.msra.mxu0 0
      %709 = vmatprep.subr.bf16.mxu0 0
      %710 = vmatpush1.bf16.msra.mxu0 0
      %711 = vmatprep.subr.bf16.mxu0 0
      %712 = vmatpush1.bf16.msra.mxu0 0
      %713 = vmatprep.subr.bf16.mxu0 0
      %714 = vmatpush1.bf16.msra.mxu0 0
      %715 = vmatprep.subr.bf16.mxu0 0
      %716 = vmatpush1.bf16.msra.mxu0 0
      %717 = vmatprep.subr.bf16.mxu0 0
      %718 = vmatpush1.bf16.msra.mxu0 0
      %719 = vmatprep.subr.bf16.mxu0 0
      %720 = vmatpush1.bf16.msra.mxu0 0
      %721 = vmatprep.subr.bf16.mxu0 0
      %722 = vmatpush1.bf16.msra.mxu0 0
      %723 = vmatprep.subr.bf16.mxu0 0
      %724 = vmatpush1.bf16.msra.mxu0 0
      %725 = vmatprep.subr.bf16.mxu0 0
      %726 = vmatpush1.bf16.msra.mxu0 0
      %727 = vmatprep.subr.bf16.mxu0 0
      %728 = vmatpush1.bf16.msra.mxu0 0
      %729 = vmatprep.subr.bf16.mxu0 0
      %730 = vmatpush1.bf16.msra.mxu0 0
      %731 = vmatprep.mubr.bf16.mxu0 0
      %732 = vmatmul.mubr.bf16.gmra.mrb[0].mxu0 %v697
      %v733 = vpop.f32.mrb[0].mxu0
      %v734 = vadd.f32 0.0, %v733
      %v735 = vpop.f32.mrb[0].mxu0
      %v736 = vpop.f32.mrb[0].mxu0
      %v737 = vpop.f32.mrb[0].mxu0
      %738 = vdwg.mxu0
      %v739 = vadd.f32 %v687, %v734
      %741 = vrot.lane.b32.xlu0 %v475, 32
      %v742 = vpop.permute.xlu0 %741
      %745 = vrot.lane.b32.xlu0 %v606, 64
      %v746 = vpop.permute.xlu0 %745
      %749 = vrot.lane.b32.xlu0 %v739, 96
      %v750 = vpop.permute.xlu0 %749
      %vm752 = vcmask 261120
      %v753 = vsel %vm752, %v344, %v742
      %vm754 = vcmask 523264
      %v755 = vsel %vm754, %v753, %v746
      %vm756 = vcmask 785408
      %v757 = vsel %vm756, %v755, %v750
      %v758 = vld [vmem:[%s2] sm:$0x1]
      %v760 = vlaneseq
      %v761 = vshrl.u32 %v760, 7
      %v762 = vsub.s32 0, %v761
      %v763 = vrot.slane %v758, %v762
      %v765 = vadd.f32 %v757, %v763
      %766 = vst [vmem:[%s188] sm:$0xff] %v765
      %p767 = scmp.lt.s32.totalorder %s18, 1
      %s768 = scalar_select %p767, %s18, 1
      %p769 = scmp.lt.s32.totalorder %s19, 0
      %s770 = scalar_select %p769, %s19, 0
      %s771 = sadd.s32 %s770, %s768
      %s772 = smul.addr %s771, 8
      %s773 = scalar_lea.vmem %s3, %s772
      // Predicated region
      $region33: #{conv1d_embedding.1} parent=31 // pred_check
        %p774 = pneg %p114
      $region34: #{conv1d_embedding.1} parent=31 // pred_check_branch
        %776 = sbr.rel (%p774) target = $region36
      $region35: #{conv1d_embedding.1} parent=31 // pred_region
        _
      $region36: #{conv1d_embedding.1} parent=31 // pred_fallthru
        _
    $region32: #{conv1d_embedding.1} parent=5 // pred_fallthru
      _
    %p777 = scmp.le.s32.totalorder 2, %s9
    // Predicated region
    $region37: #{conv1d_embedding.1} parent=5 // pred_check
      %p778 = pneg %p777
    $region38: #{conv1d_embedding.1} parent=5 // pred_check_branch
      %780 = sbr.rel (%p778) target = $region40
    $region39: #{conv1d_embedding.1} parent=5 // pred_region
      %s781 = ssub.s32 %s9, 2
      // Predicated region
      $region41: #{conv1d_embedding.1} parent=39 // pred_check
        %p782 = pneg %p120
      $region42: #{conv1d_embedding.1} parent=39 // pred_check_branch
        %784 = sbr.rel (%p782) target = $region44
      $region43: #{conv1d_embedding.1} parent=39 // pred_region
        %p785 = scmp.lt.s32.totalorder %s20, 1
        %s786 = scalar_select %p785, %s20, 1
        %p787 = scmp.lt.s32.totalorder %s21, 0
        %s788 = scalar_select %p787, %s21, 0
        %s789 = sadd.s32 %s788, %s786
        %s790 = smul.addr %s789, 8
        %s791 = scalar_lea.vmem %s3, %s790
      $region44: #{conv1d_embedding.1} parent=39 // pred_fallthru
        _
    $region40: #{conv1d_embedding.1} parent=5 // pred_fallthru
      _
  $region6: #{conv1d_embedding.1} parent=0 // loop_footer
    %s13 = sadd.s32 1, %s9
  $region7: #{conv1d_embedding.1} parent=0 // loop_footer_branch
    %8 = sbr.rel target = $region3
  $region8: #{conv1d_embedding.1} parent=0 // loop_exit
    _

</llo_original>
